<compile_context>
chip_gen: v7x
topology: tpu7x:2x2x1
jax: 0.10.0
libtpu: 0.0.40
codegen_flags: <defaults>
</compile_context>

<pallas_src>
import jax
import jax.numpy as jnp
from jax.experimental import pallas as pl
from jax.experimental.pallas import tpu as pltpu


def _round_up(n, m):
    return ((n + m - 1) // m) * m


# ---------------------------------------------------------------------------
# Pallas kernel: fused 2-layer MLP (matmul + bias + relu + matmul + bias)
# one grid step processes a (TB, D_IN) activation tile; weights are resident
# ---------------------------------------------------------------------------
def _mlp_kernel(x_ref, w1_ref, b1_ref, w2_ref, b2_ref, o_ref):
    # layer 1: (TB, Din) @ (Din, H) -> f32 accumulation on the MXU
    h = jnp.dot(x_ref[...], w1_ref[...], preferred_element_type=jnp.float32)
    # bias add + ReLU on the f32 accumulator (VPU-safe on v5e even in amp mode)
    h = jnp.maximum(h + b1_ref[...], 0.0)
    if w2_ref.dtype != jnp.float32:
        # amp path only: feed bf16 back into the MXU for layer 2
        h = h.astype(w2_ref.dtype)
    # layer 2: (TB, H) @ (H, Dout) -> f32 accumulation
    o = jnp.dot(h, w2_ref[...], preferred_element_type=jnp.float32) + b2_ref[...]
    o_ref[...] = o.astype(o_ref.dtype)


def _mlp_pallas(x, w1, b1, w2, b2, *, out_dtype=jnp.float32,
                block_b=512, single_step_budget_bytes=8 << 20):
    B, d_in = x.shape
    d_h = w1.shape[1]
    d_out = w2.shape[1]
    assert d_in % 128 == 0 and d_h % 128 == 0 and d_out % 128 == 0, (
        "feature dims must be lane-aligned (multiples of 128)")
    out_itemsize = jnp.dtype(out_dtype).itemsize

    resident_bytes = (w1.size * w1.dtype.itemsize + b1.size * b1.dtype.itemsize
                      + w2.size * w2.dtype.itemsize + b2.size * b2.dtype.itemsize)
    # VMEM a whole-problem-resident launch would need: weights single-buffered
    # + double-buffered x / out slabs.
    whole_bytes = resident_bytes + 2 * (x.size * x.dtype.itemsize
                                        + B * d_out * out_itemsize)

    pad = 0
    if whole_bytes <= single_step_budget_bytes:
        # Small problem (the shipped case): ONE grid step, everything resident.
        # Removes ~0.35 us/step pipeline overhead plus prologue/epilogue, and
        # needs no padding (block == full dim, so no (8,128) constraint).
        tb = B
    else:
        # Large problem: batch-tiled grid. 256-512-row tiles keep v6e/v7x's
        # 256-wide MXUs full and amortize per-step overhead; prefer a tile that
        # divides B exactly so no jnp.pad (extra HBM read+write of x) is needed.
        tb = min(block_b, _round_up(B, 16))
        while B % tb != 0 and tb > 128:
            tb //= 2
        pad = (-B) % tb
        if pad:
            # TODO(synk): mask the ragged tail in-kernel (predicated store)
            # instead of materializing a padded copy of x in HBM.
            x = jnp.pad(x, ((0, pad), (0, 0)))
    bp = B + pad
    grid = (bp // tb,)

    cost = pl.CostEstimate(
        flops=2 * bp * (d_in * d_h + d_h * d_out),
        transcendentals=0,
        bytes_accessed=(bp * d_in * x.dtype.itemsize
                        + resident_bytes
                        + bp * d_out * out_itemsize),
    )

    # Constant-index (resident) operands: single-buffered so they occupy 1x
    # their size in VMEM instead of the default double-buffered 2x.
    def _resident(shape):
        return pl.BlockSpec(shape, lambda i: (0, 0),
                            pipeline_mode=pl.Buffered(1))

    vmem_need = (resident_bytes
                 + 2 * tb * d_in * x.dtype.itemsize
                 + 2 * tb * d_out * out_itemsize)
    compiler_kwargs = dict(dimension_semantics=("parallel",))
    # Only raise the scoped-VMEM budget when the default is actually too small;
    # cap well below v7x's 64 MiB physical VMEM so the compiler keeps room for
    # internal scratch / IO buffers.
    if vmem_need > 24 << 20:
        compiler_kwargs["vmem_limit_bytes"] = min(int(1.5 * vmem_need), 48 << 20)

    out = pl.pallas_call(
        _mlp_kernel,
        out_shape=jax.ShapeDtypeStruct((bp, d_out), out_dtype),
        grid_spec=pltpu.PrefetchScalarGridSpec(
            num_scalar_prefetch=0,
            grid=grid,
            in_specs=[
                pl.BlockSpec((tb, d_in), lambda i: (i, 0)),   # x tile: pipelined
                _resident((d_in, d_h)),                       # w1: VMEM-resident
                _resident((1, d_h)),                          # b1: resident
                _resident((d_h, d_out)),                      # w2: resident
                _resident((1, d_out)),                        # b2: resident
            ],
            out_specs=pl.BlockSpec((tb, d_out), lambda i: (i, 0)),  # lane-dense
        ),
        compiler_params=pltpu.CompilerParams(**compiler_kwargs),
        cost_estimate=cost,
    )(x, w1, b1, w2, b2)

    if pad:
        out = out[:B]
    return out


# ---------------------------------------------------------------------------
# Inner model (Model_Interface stand-in): deterministic params, Pallas hot path
# ---------------------------------------------------------------------------
class SyntheticInnerModel:
    def __init__(self, d_in=128, d_hidden=256, d_out=128, key=None):
        key = jax.random.PRNGKey(0) if key is None else key
        k1, k2 = jax.random.split(key)
        self.w1 = (jax.random.normal(k1, (d_in, d_hidden), jnp.float32)
                   / jnp.sqrt(d_in)).astype(jnp.float32)
        self.b1 = jnp.zeros((1, d_hidden), jnp.float32)
        self.w2 = (jax.random.normal(k2, (d_hidden, d_out), jnp.float32)
                   / jnp.sqrt(d_hidden)).astype(jnp.float32)
        self.b2 = jnp.zeros((1, d_out), jnp.float32)
        # AMP ("autocast") weight copies cached ONCE at init so the hot path
        # never re-casts f32->bf16 (would be 1.5x weight bytes of extra HBM
        # traffic per forward, outside the kernel where nothing hides it).
        self.w1_bf16 = self.w1.astype(jnp.bfloat16)
        self.w2_bf16 = self.w2.astype(jnp.bfloat16)

    def train_forward(self, x, amp=False):
        if amp:
            # TPU analog of torch.cuda.amp.autocast: bf16 MXU operands,
            # f32 accumulation / bias / ReLU, bf16 output writeback.
            return _mlp_pallas(x.astype(jnp.bfloat16),
                               self.w1_bf16, self.b1,
                               self.w2_bf16, self.b2,
                               out_dtype=jnp.bfloat16)
        return _mlp_pallas(x, self.w1, self.b1, self.w2, self.b2,
                           out_dtype=jnp.float32)

    def valid_forward(self, x):
        return self.train_forward(x, amp=False)


# ---------------------------------------------------------------------------
# TH_ModelFace equivalent: pure routing wrapper (no tensor math of its own)
# ---------------------------------------------------------------------------
class THModelFace:
    def __init__(self, model, amp=False):
        self.amp = amp
        self.model = model

    def forward(self, *args, valid=False, **kwargs):
        if valid:
            return self.valid_forward(*args, **kwargs)
        # self.amp routes through the bf16 ("autocast") path inside train_forward.
        return self.model.train_forward(*args, amp=self.amp, **kwargs)

    def valid_forward(self, *args, **kwargs):
        # torch.no_grad() analog: block gradient flow through the eval path.
        out = self.model.valid_forward(*args, **kwargs)
        return jax.lax.stop_gradient(out)

    __call__ = forward


if __name__ == "__main__":
    key = jax.random.PRNGKey(0)
    k_x, k_p = jax.random.split(key)

    # MXU/lane-aligned but still small: whole problem fits one VMEM-resident step
    B, D_IN, D_H, D_OUT = 256, 128, 256, 128
    x = jax.random.normal(k_x, (B, D_IN), jnp.float32)

    inner = SyntheticInnerModel(D_IN, D_H, D_OUT, key=k_p)
    face = THModelFace(inner, amp=False)

    # train path (model.train_forward) -> single-step, fully resident
    y_train = face(x, valid=False)
    # valid path (model.valid_forward under "no_grad")
    y_valid = face(x, valid=True)
    # amp path (autocast analog -> cached bf16 weights, bf16 output)
    y_amp = THModelFace(inner, amp=True)(x, valid=False)
    # also exercise the batch-tiled (grid > 1) path used for large B
    y_tiled = _mlp_pallas(x, inner.w1, inner.b1, inner.w2, inner.b2,
                          out_dtype=jnp.float32, block_b=128,
                          single_step_budget_bytes=0)

    jax.block_until_ready((y_train, y_valid, y_amp, y_tiled))

    # pure-JAX reference for correctness
    ref = jnp.maximum(x @ inner.w1 + inner.b1, 0.0) @ inner.w2 + inner.b2

    assert y_train.shape == (B, D_OUT) and y_train.dtype == jnp.float32
    assert y_valid.shape == (B, D_OUT)
    assert y_amp.shape == (B, D_OUT) and y_amp.dtype == jnp.bfloat16
    assert jnp.allclose(y_train, y_valid)                        # same math, same path
    assert jnp.allclose(y_train, y_tiled, rtol=1e-4, atol=1e-4)  # tiled == single-step
    assert jnp.allclose(y_train, ref, rtol=2e-2, atol=2e-2)      # f32 path vs reference
    assert jnp.allclose(y_amp.astype(jnp.float32), ref, rtol=1e-1, atol=1e-1)  # bf16 path

    print("KERNEL_OK")
</pallas_src>

<mosaic_0001>
module attributes {stable_mosaic.version = 11 : i64} {
  func.func @_mlp_kernel(%arg0: i32, %arg1: memref<256x128xf32, #tpu.memory_space<vmem>>, %arg2: memref<128x256xf32, #tpu.memory_space<vmem>>, %arg3: memref<1x256xf32, #tpu.memory_space<vmem>>, %arg4: memref<256x128xf32, #tpu.memory_space<vmem>>, %arg5: memref<1x128xf32, #tpu.memory_space<vmem>>, %arg6: memref<256x128xf32, #tpu.memory_space<vmem>>) attributes {dimension_semantics = [#tpu.dimension_semantics<parallel>], iteration_bounds = array<i64: 1>, scalar_prefetch = 0 : i64, scratch_operands = 0 : i64, tpu.core_type = #tpu.core_type<tc>, window_params = [{transform_indices = @transform_0, window_bounds = array<i64: 256, 128>}, {pipeline_mode = #tpu.pipeline_mode<synchronous>, transform_indices = @transform_1, window_bounds = array<i64: 128, 256>}, {pipeline_mode = #tpu.pipeline_mode<synchronous>, transform_indices = @transform_2, window_bounds = array<i64: 1, 256>}, {pipeline_mode = #tpu.pipeline_mode<synchronous>, transform_indices = @transform_3, window_bounds = array<i64: 256, 128>}, {pipeline_mode = #tpu.pipeline_mode<synchronous>, transform_indices = @transform_4, window_bounds = array<i64: 1, 128>}, {transform_indices = @transform_5, window_bounds = array<i64: 256, 128>}]} {
    %c0 = arith.constant 0 : index
    %c0_0 = arith.constant 0 : index
    %0 = vector.load %arg1[%c0, %c0_0] : memref<256x128xf32, #tpu.memory_space<vmem>>, vector<256x128xf32>
    %c0_1 = arith.constant 0 : index
    %c0_2 = arith.constant 0 : index
    %1 = vector.load %arg2[%c0_1, %c0_2] : memref<128x256xf32, #tpu.memory_space<vmem>>, vector<128x256xf32>
    %cst = arith.constant dense<0.000000e+00> : vector<256x256xf32>
    %2 = tpu.matmul %0, %1, %cst {dimension_numbers = #tpu.dot_dimension_numbers<[1], [0], [0], [1], [0, 0, 1, 1], [], []>} : vector<256x128xf32>, vector<128x256xf32>, vector<256x256xf32> -> vector<256x256xf32>
    %c0_3 = arith.constant 0 : index
    %c0_4 = arith.constant 0 : index
    %3 = vector.load %arg3[%c0_3, %c0_4] : memref<1x256xf32, #tpu.memory_space<vmem>>, vector<1x256xf32>
    %4 = vector.broadcast %3 : vector<1x256xf32> to vector<256x256xf32>
    %5 = arith.addf %2, %4 : vector<256x256xf32>
    %cst_5 = arith.constant 0.000000e+00 : f32
    %6 = vector.broadcast %cst_5 : f32 to vector<256x256xf32>
    %7 = arith.maximumf %5, %6 : vector<256x256xf32>
    %c0_6 = arith.constant 0 : index
    %c0_7 = arith.constant 0 : index
    %8 = vector.load %arg4[%c0_6, %c0_7] : memref<256x128xf32, #tpu.memory_space<vmem>>, vector<256x128xf32>
    %cst_8 = arith.constant dense<0.000000e+00> : vector<256x128xf32>
    %9 = tpu.matmul %7, %8, %cst_8 {dimension_numbers = #tpu.dot_dimension_numbers<[1], [0], [0], [1], [0, 0, 1, 1], [], []>} : vector<256x256xf32>, vector<256x128xf32>, vector<256x128xf32> -> vector<256x128xf32>
    %c0_9 = arith.constant 0 : index
    %c0_10 = arith.constant 0 : index
    %10 = vector.load %arg5[%c0_9, %c0_10] : memref<1x128xf32, #tpu.memory_space<vmem>>, vector<1x128xf32>
    %11 = vector.broadcast %10 : vector<1x128xf32> to vector<256x128xf32>
    %12 = arith.addf %9, %11 : vector<256x128xf32>
    %c0_11 = arith.constant 0 : index
    %c0_12 = arith.constant 0 : index
    %13 = vector.load %arg6[%c0_11, %c0_12] : memref<256x128xf32, #tpu.memory_space<vmem>>, vector<256x128xf32>
    tpu.vector_store %arg6[%c0_11, %c0_12], %12 {strides = array<i32>} : memref<256x128xf32, #tpu.memory_space<vmem>>, vector<256x128xf32>,
    return
  }
  func.func @transform_0(%arg0: i32) -> (i32, i32) {
    %c0_i32 = arith.constant 0 : i32
    %c0_i32_0 = arith.constant 0 : i32
    return %arg0, %c0_i32 : i32, i32
  }
  func.func @transform_1(%arg0: i32) -> (i32, i32) {
    %c0_i32 = arith.constant 0 : i32
    %c0_i32_0 = arith.constant 0 : i32
    %c0_i32_1 = arith.constant 0 : i32
    return %c0_i32, %c0_i32_0 : i32, i32
  }
  func.func @transform_2(%arg0: i32) -> (i32, i32) {
    %c0_i32 = arith.constant 0 : i32
    %c0_i32_0 = arith.constant 0 : i32
    %c0_i32_1 = arith.constant 0 : i32
    return %c0_i32, %c0_i32_0 : i32, i32
  }
  func.func @transform_3(%arg0: i32) -> (i32, i32) {
    %c0_i32 = arith.constant 0 : i32
    %c0_i32_0 = arith.constant 0 : i32
    %c0_i32_1 = arith.constant 0 : i32
    return %c0_i32, %c0_i32_0 : i32, i32
  }
  func.func @transform_4(%arg0: i32) -> (i32, i32) {
    %c0_i32 = arith.constant 0 : i32
    %c0_i32_0 = arith.constant 0 : i32
    %c0_i32_1 = arith.constant 0 : i32
    return %c0_i32, %c0_i32_0 : i32, i32
  }
  func.func @transform_5(%arg0: i32) -> (i32, i32) {
    %c0_i32 = arith.constant 0 : i32
    %c0_i32_0 = arith.constant 0 : i32
    return %arg0, %c0_i32 : i32, i32
  }
}

</mosaic_0001>

<llo_original>
// kernel: tpu_custom_call.1
$region0: #{tpu_custom_call.1}
  #allocation0 [shape = 'u32[]', space=smem, size = 0x4, offset = 0x4, fixed_abs, tag = 'smem constant byte address 0x4 - core index']
  #allocation1 [shape = 'u32[144,128]{1,0:T(1,128)}', space=vmem, size = 0x12000, scoped, tag = 'internal scratch']
  %s0 = inlined_call_operand.hbm [shape: f32[256,128], index: 0, kind: input, shape index: {}]
  %s1 = inlined_call_operand.hbm [shape: f32[128,256], index: 1, kind: input, shape index: {}]
  %s2 = inlined_call_operand.vmem [shape: f32[1,256], index: 2, kind: input, shape index: {}]
  %s3 = inlined_call_operand.hbm [shape: f32[256,128], index: 3, kind: input, shape index: {}]
  %s4 = inlined_call_operand.vmem [shape: f32[1,128], index: 4, kind: input, shape index: {}]
  %s5 = inlined_call_operand.hbm [shape: f32[256,128], index: 5, kind: output, shape index: {}]
  %s6 = sld [smem:[#allocation0]]
  $region42: #{tpu_custom_call.1} parent=0
    _
  %s8 = ssub.s32 1, %s6
  %s9 = scalar_select 0, %s8, %s6
  $region1: #{tpu_custom_call.1} parent=0
    #allocation2 [shape = 'u8[131072]{0}', space=vmem, size = 0x20000, scoped, tag = 'input window, operand 0, single buffered']
    #allocation3 [shape = 's32[1]{0}', space=sflag, size = 0x4, scoped, tag = 'scoped memory for tpu_custom_call.1']
    #allocation4 [shape = 's32[1]{0}', space=sflag, size = 0x4, scoped, tag = 'scoped memory for tpu_custom_call.1']
    #allocation5 [shape = 'u8[131072]{0}', space=vmem, size = 0x20000, scoped, tag = 'input window, operand 1, single buffered']
    #allocation6 [shape = 's32[1]{0}', space=sflag, size = 0x4, scoped, tag = 'scoped memory for tpu_custom_call.1']
    #allocation7 [shape = 'u8[131072]{0}', space=vmem, size = 0x20000, scoped, tag = 'input window, operand 3, single buffered']
    #allocation8 [shape = 'u8[131072]{0}', space=vmem, size = 0x20000, scoped, tag = 'output window, operand 0, single buffered']
    %10 = vsyncpa [#allocation3], 0
    %11 = vsyncpa [#allocation6], 0
    %12 = vsyncpa [#allocation4], 0
    // Predicated region
    $region2: #{tpu_custom_call.1} parent=1 // pred_check
      _
    $region3: #{tpu_custom_call.1} parent=1 // pred_check_branch
      %14 = sbr.rel (0) target = $region5
    $region4: #{tpu_custom_call.1} parent=1 // pred_region
      %s16 = ssub.s32 4096, 4096
      %17 = vsyncadd [#allocation3], %s16
      %s18 = sshll.u32 [#allocation2], 4
      %s19 = int_to_ptr.vmem [resolvable:$true] %s18
      %24 = dma.hbm_to_vmem [thread:$0]  %s0, 4096, %s19, [#allocation3], 128, 128, 8
    $region5: #{tpu_custom_call.1} parent=1 // pred_fallthru
      _
    // Predicated region
    $region6: #{tpu_custom_call.1} parent=1 // pred_check
      _
    $region7: #{tpu_custom_call.1} parent=1 // pred_check_branch
      %26 = sbr.rel (0) target = $region9
    $region8: #{tpu_custom_call.1} parent=1 // pred_region
      %s28 = ssub.s32 4096, 4096
      %29 = vsyncadd [#allocation6], %s28
      %s30 = sshll.u32 [#allocation5], 4
      %s31 = int_to_ptr.vmem [resolvable:$true] %s30
      %36 = dma.hbm_to_vmem [thread:$0]  %s1, 4096, %s31, [#allocation6], 256, 256, 16
    $region9: #{tpu_custom_call.1} parent=1 // pred_fallthru
      _
    // Predicated region
    $region10: #{tpu_custom_call.1} parent=1 // pred_check
      _
    $region11: #{tpu_custom_call.1} parent=1 // pred_check_branch
      %38 = sbr.rel (0) target = $region13
    $region12: #{tpu_custom_call.1} parent=1 // pred_region
      _
    $region13: #{tpu_custom_call.1} parent=1 // pred_fallthru
      _
    // Predicated region
    $region14: #{tpu_custom_call.1} parent=1 // pred_check
      _
    $region15: #{tpu_custom_call.1} parent=1 // pred_check_branch
      %40 = sbr.rel (0) target = $region17
    $region16: #{tpu_custom_call.1} parent=1 // pred_region
      %s42 = ssub.s32 4096, 4096
      %43 = vsyncadd [#allocation6], %s42
      %s44 = sshll.u32 [#allocation7], 4
      %s45 = int_to_ptr.vmem [resolvable:$true] %s44
      %50 = dma.hbm_to_vmem [thread:$0]  %s3, 4096, %s45, [#allocation6], 128, 128, 8
    $region17: #{tpu_custom_call.1} parent=1 // pred_fallthru
      _
    // Predicated region
    $region18: #{tpu_custom_call.1} parent=1 // pred_check
      _
    $region19: #{tpu_custom_call.1} parent=1 // pred_check_branch
      %52 = sbr.rel (0) target = $region21
    $region20: #{tpu_custom_call.1} parent=1 // pred_region
      _
    $region21: #{tpu_custom_call.1} parent=1 // pred_fallthru
      _
    // Predicated region
    $region22: #{tpu_custom_call.1} parent=1 // pred_check
      _
    $region23: #{tpu_custom_call.1} parent=1 // pred_check_branch
      %54 = sbr.rel (0) target = $region25
    $region24: #{tpu_custom_call.1} parent=1 // pred_region
      %55 = dma.done [#allocation3], 4096
    $region25: #{tpu_custom_call.1} parent=1 // pred_fallthru
      _
    // Predicated region
    $region26: #{tpu_custom_call.1} parent=1 // pred_check
      _
    $region27: #{tpu_custom_call.1} parent=1 // pred_check_branch
      %57 = sbr.rel (0) target = $region29
    $region28: #{tpu_custom_call.1} parent=1 // pred_region
      %58 = dma.done [#allocation6], 4096
    $region29: #{tpu_custom_call.1} parent=1 // pred_fallthru
      _
    // Predicated region
    $region30: #{tpu_custom_call.1} parent=1 // pred_check
      _
    $region31: #{tpu_custom_call.1} parent=1 // pred_check_branch
      %60 = sbr.rel (0) target = $region33
    $region32: #{tpu_custom_call.1} parent=1 // pred_region
      %61 = dma.done [#allocation6], 4096
    $region33: #{tpu_custom_call.1} parent=1 // pred_fallthru
      _
    %v62 = vld [vmem:[#allocation2] sm:$0xff]
    %v63 = vld [vmem:[#allocation2 + $0x8] sm:$0xff]
    %v64 = vld [vmem:[#allocation2 + $0x10] sm:$0xff]
    %v65 = vld [vmem:[#allocation2 + $0x18] sm:$0xff]
    %v66 = vld [vmem:[#allocation2 + $0x20] sm:$0xff]
    %v67 = vld [vmem:[#allocation2 + $0x28] sm:$0xff]
    %v68 = vld [vmem:[#allocation2 + $0x30] sm:$0xff]
    %v69 = vld [vmem:[#allocation2 + $0x38] sm:$0xff]
    %v70 = vld [vmem:[#allocation2 + $0x40] sm:$0xff]
    %v71 = vld [vmem:[#allocation2 + $0x48] sm:$0xff]
    %v72 = vld [vmem:[#allocation2 + $0x50] sm:$0xff]
    %v73 = vld [vmem:[#allocation2 + $0x58] sm:$0xff]
    %v74 = vld [vmem:[#allocation2 + $0x60] sm:$0xff]
    %v75 = vld [vmem:[#allocation2 + $0x68] sm:$0xff]
    %v76 = vld [vmem:[#allocation2 + $0x70] sm:$0xff]
    %v77 = vld [vmem:[#allocation2 + $0x78] sm:$0xff]
    %v78 = vld [vmem:[#allocation2 + $0x80] sm:$0xff]
    %v79 = vld [vmem:[#allocation2 + $0x88] sm:$0xff]
    %v80 = vld [vmem:[#allocation2 + $0x90] sm:$0xff]
    %v81 = vld [vmem:[#allocation2 + $0x98] sm:$0xff]
    %v82 = vld [vmem:[#allocation2 + $0xa0] sm:$0xff]
    %v83 = vld [vmem:[#allocation2 + $0xa8] sm:$0xff]
    %v84 = vld [vmem:[#allocation2 + $0xb0] sm:$0xff]
    %v85 = vld [vmem:[#allocation2 + $0xb8] sm:$0xff]
    %v86 = vld [vmem:[#allocation2 + $0xc0] sm:$0xff]
    %v87 = vld [vmem:[#allocation2 + $0xc8] sm:$0xff]
    %v88 = vld [vmem:[#allocation2 + $0xd0] sm:$0xff]
    %v89 = vld [vmem:[#allocation2 + $0xd8] sm:$0xff]
    %v90 = vld [vmem:[#allocation2 + $0xe0] sm:$0xff]
    %v91 = vld [vmem:[#allocation2 + $0xe8] sm:$0xff]
    %v92 = vld [vmem:[#allocation2 + $0xf0] sm:$0xff]
    %v93 = vld [vmem:[#allocation2 + $0xf8] sm:$0xff]
    %v94 = vld [vmem:[#allocation5] sm:$0xff]
    %v95 = vld [vmem:[#allocation5 + $0x8] sm:$0xff]
    %v96 = vld [vmem:[#allocation5 + $0x10] sm:$0xff]
    %v97 = vld [vmem:[#allocation5 + $0x18] sm:$0xff]
    %v98 = vld [vmem:[#allocation5 + $0x20] sm:$0xff]
    %v99 = vld [vmem:[#allocation5 + $0x28] sm:$0xff]
    %v100 = vld [vmem:[#allocation5 + $0x30] sm:$0xff]
    %v101 = vld [vmem:[#allocation5 + $0x38] sm:$0xff]
    %v102 = vld [vmem:[#allocation5 + $0x40] sm:$0xff]
    %v103 = vld [vmem:[#allocation5 + $0x48] sm:$0xff]
    %v104 = vld [vmem:[#allocation5 + $0x50] sm:$0xff]
    %v105 = vld [vmem:[#allocation5 + $0x58] sm:$0xff]
    %v106 = vld [vmem:[#allocation5 + $0x60] sm:$0xff]
    %v107 = vld [vmem:[#allocation5 + $0x68] sm:$0xff]
    %v108 = vld [vmem:[#allocation5 + $0x70] sm:$0xff]
    %v109 = vld [vmem:[#allocation5 + $0x78] sm:$0xff]
    %v110 = vld [vmem:[#allocation5 + $0x80] sm:$0xff]
    %v111 = vld [vmem:[#allocation5 + $0x88] sm:$0xff]
    %v112 = vld [vmem:[#allocation5 + $0x90] sm:$0xff]
    %v113 = vld [vmem:[#allocation5 + $0x98] sm:$0xff]
    %v114 = vld [vmem:[#allocation5 + $0xa0] sm:$0xff]
    %v115 = vld [vmem:[#allocation5 + $0xa8] sm:$0xff]
    %v116 = vld [vmem:[#allocation5 + $0xb0] sm:$0xff]
    %v117 = vld [vmem:[#allocation5 + $0xb8] sm:$0xff]
    %v118 = vld [vmem:[#allocation5 + $0xc0] sm:$0xff]
    %v119 = vld [vmem:[#allocation5 + $0xc8] sm:$0xff]
    %v120 = vld [vmem:[#allocation5 + $0xd0] sm:$0xff]
    %v121 = vld [vmem:[#allocation5 + $0xd8] sm:$0xff]
    %v122 = vld [vmem:[#allocation5 + $0xe0] sm:$0xff]
    %v123 = vld [vmem:[#allocation5 + $0xe8] sm:$0xff]
    %v124 = vld [vmem:[#allocation5 + $0xf0] sm:$0xff]
    %v125 = vld [vmem:[#allocation5 + $0xf8] sm:$0xff]
    %v126 = vld [vmem:[%s2] sm:$0x3]
    %v128 = vlaneseq
    %v129 = vshrl.u32 %v128, 7
    %v130 = vsub.s32 0, %v129
    %v131 = vrot.slane %v126, %v130
    %v132 = vlaneseq
    %v133 = vshrl.u32 %v132, 7
    %v134 = vsub.s32 1, %v133
    %v135 = vrot.slane %v126, %v134
    %138 = vmatprep.subr.mxu0 %v95
    %139 = vmatpush1.msra.mxu0 %v94
    %140 = vmatprep.subr.mxu0 %v97
    %141 = vmatpush1.msra.mxu0 %v96
    %142 = vmatprep.subr.mxu0 %v99
    %143 = vmatpush1.msra.mxu0 %v98
    %144 = vmatprep.subr.mxu0 %v101
    %145 = vmatpush1.msra.mxu0 %v100
    %146 = vmatprep.subr.mxu0 %v103
    %147 = vmatpush1.msra.mxu0 %v102
    %148 = vmatprep.subr.mxu0 %v105
    %149 = vmatpush1.msra.mxu0 %v104
    %150 = vmatprep.subr.mxu0 %v107
    %151 = vmatpush1.msra.mxu0 %v106
    %152 = vmatprep.subr.mxu0 %v109
    %153 = vmatpush1.msra.mxu0 %v108
    %154 = vmatprep.subr.mxu0 %v111
    %155 = vmatpush1.msra.mxu0 %v110
    %156 = vmatprep.subr.mxu0 %v113
    %157 = vmatpush1.msra.mxu0 %v112
    %158 = vmatprep.subr.mxu0 %v115
    %159 = vmatpush1.msra.mxu0 %v114
    %160 = vmatprep.subr.mxu0 %v117
    %161 = vmatpush1.msra.mxu0 %v116
    %162 = vmatprep.subr.mxu0 %v119
    %163 = vmatpush1.msra.mxu0 %v118
    %164 = vmatprep.subr.mxu0 %v121
    %165 = vmatpush1.msra.mxu0 %v120
    %166 = vmatprep.subr.mxu0 %v123
    %167 = vmatpush1.msra.mxu0 %v122
    %168 = vmatprep.subr.mxu0 %v125
    %169 = vmatpush1.msra.mxu0 %v124
    %170 = vmatprep.subr.mxu0 0.0
    %171 = vmatpush1.msra.mxu0 0.0
    %172 = vmatprep.subr.mxu0 0.0
    %173 = vmatpush1.msra.mxu0 0.0
    %174 = vmatprep.subr.mxu0 0.0
    %175 = vmatpush1.msra.mxu0 0.0
    %176 = vmatprep.subr.mxu0 0.0
    %177 = vmatpush1.msra.mxu0 0.0
    %178 = vmatprep.subr.mxu0 0.0
    %179 = vmatpush1.msra.mxu0 0.0
    %180 = vmatprep.subr.mxu0 0.0
    %181 = vmatpush1.msra.mxu0 0.0
    %182 = vmatprep.subr.mxu0 0.0
    %183 = vmatpush1.msra.mxu0 0.0
    %184 = vmatprep.subr.mxu0 0.0
    %185 = vmatpush1.msra.mxu0 0.0
    %186 = vmatprep.subr.mxu0 0.0
    %187 = vmatpush1.msra.mxu0 0.0
    %188 = vmatprep.subr.mxu0 0.0
    %189 = vmatpush1.msra.mxu0 0.0
    %190 = vmatprep.subr.mxu0 0.0
    %191 = vmatpush1.msra.mxu0 0.0
    %192 = vmatprep.subr.mxu0 0.0
    %193 = vmatpush1.msra.mxu0 0.0
    %194 = vmatprep.subr.mxu0 0.0
    %195 = vmatpush1.msra.mxu0 0.0
    %196 = vmatprep.subr.mxu0 0.0
    %197 = vmatpush1.msra.mxu0 0.0
    %198 = vmatprep.subr.mxu0 0.0
    %199 = vmatpush1.msra.mxu0 0.0
    %200 = vmatprep.subr.mxu0 0.0
    %201 = vmatpush1.msra.mxu0 0.0
    %202 = vmatprep.mubr.f32.mxu0 0.0
    %203 = vmatmul.mubr.f32.gmra.mrb[0].mxu0 %v62
    %v204 = vpop.f32.mrb[0].mxu0
    %v205 = vadd.f32 %v131, %v204
    %v206 = vpop.f32.mrb[0].mxu0
    %v207 = vadd.f32 %v135, %v206
    %208 = vmatprep.mubr.f32.mxu0 0.0
    %209 = vmatmul.mubr.f32.gmra.mrb[0].mxu0 %v63
    %v210 = vpop.f32.mrb[0].mxu0
    %v211 = vadd.f32 %v131, %v210
    %v212 = vpop.f32.mrb[0].mxu0
    %v213 = vadd.f32 %v135, %v212
    %214 = vmatprep.mubr.f32.mxu0 0.0
    %215 = vmatmul.mubr.f32.gmra.mrb[0].mxu0 %v64
    %v216 = vpop.f32.mrb[0].mxu0
    %v217 = vadd.f32 %v131, %v216
    %v218 = vpop.f32.mrb[0].mxu0
    %v219 = vadd.f32 %v135, %v218
    %220 = vmatprep.mubr.f32.mxu0 0.0
    %221 = vmatmul.mubr.f32.gmra.mrb[0].mxu0 %v65
    %v222 = vpop.f32.mrb[0].mxu0
    %v223 = vadd.f32 %v131, %v222
    %v224 = vpop.f32.mrb[0].mxu0
    %v225 = vadd.f32 %v135, %v224
    %226 = vmatprep.mubr.f32.mxu0 0.0
    %227 = vmatmul.mubr.f32.gmra.mrb[0].mxu0 %v66
    %v228 = vpop.f32.mrb[0].mxu0
    %v229 = vadd.f32 %v131, %v228
    %v230 = vpop.f32.mrb[0].mxu0
    %v231 = vadd.f32 %v135, %v230
    %232 = vmatprep.mubr.f32.mxu0 0.0
    %233 = vmatmul.mubr.f32.gmra.mrb[0].mxu0 %v67
    %v234 = vpop.f32.mrb[0].mxu0
    %v235 = vadd.f32 %v131, %v234
    %v236 = vpop.f32.mrb[0].mxu0
    %v237 = vadd.f32 %v135, %v236
    %238 = vmatprep.mubr.f32.mxu0 0.0
    %239 = vmatmul.mubr.f32.gmra.mrb[0].mxu0 %v68
    %v240 = vpop.f32.mrb[0].mxu0
    %v241 = vadd.f32 %v131, %v240
    %v242 = vpop.f32.mrb[0].mxu0
    %v243 = vadd.f32 %v135, %v242
    %244 = vmatprep.mubr.f32.mxu0 0.0
    %245 = vmatmul.mubr.f32.gmra.mrb[0].mxu0 %v69
    %v246 = vpop.f32.mrb[0].mxu0
    %v247 = vadd.f32 %v131, %v246
    %v248 = vpop.f32.mrb[0].mxu0
    %v249 = vadd.f32 %v135, %v248
    %250 = vmatprep.mubr.f32.mxu0 0.0
    %251 = vmatmul.mubr.f32.gmra.mrb[0].mxu0 %v70
    %v252 = vpop.f32.mrb[0].mxu0
    %v253 = vadd.f32 %v131, %v252
    %v254 = vpop.f32.mrb[0].mxu0
    %v255 = vadd.f32 %v135, %v254
    %256 = vmatprep.mubr.f32.mxu0 0.0
    %257 = vmatmul.mubr.f32.gmra.mrb[0].mxu0 %v71
    %v258 = vpop.f32.mrb[0].mxu0
    %v259 = vadd.f32 %v131, %v258
    %v260 = vpop.f32.mrb[0].mxu0
    %v261 = vadd.f32 %v135, %v260
    %262 = vmatprep.mubr.f32.mxu0 0.0
    %263 = vmatmul.mubr.f32.gmra.mrb[0].mxu0 %v72
    %v264 = vpop.f32.mrb[0].mxu0
    %v265 = vadd.f32 %v131, %v264
    %v266 = vpop.f32.mrb[0].mxu0
    %v267 = vadd.f32 %v135, %v266
    %268 = vmatprep.mubr.f32.mxu0 0.0
    %269 = vmatmul.mubr.f32.gmra.mrb[0].mxu0 %v73
    %v270 = vpop.f32.mrb[0].mxu0
    %v271 = vadd.f32 %v131, %v270
    %v272 = vpop.f32.mrb[0].mxu0
    %v273 = vadd.f32 %v135, %v272
    %274 = vmatprep.mubr.f32.mxu0 0.0
    %275 = vmatmul.mubr.f32.gmra.mrb[0].mxu0 %v74
    %v276 = vpop.f32.mrb[0].mxu0
    %v277 = vadd.f32 %v131, %v276
    %v278 = vpop.f32.mrb[0].mxu0
    %v279 = vadd.f32 %v135, %v278
    %280 = vmatprep.mubr.f32.mxu0 0.0
    %281 = vmatmul.mubr.f32.gmra.mrb[0].mxu0 %v75
    %v282 = vpop.f32.mrb[0].mxu0
    %v283 = vadd.f32 %v131, %v282
    %v284 = vpop.f32.mrb[0].mxu0
    %v285 = vadd.f32 %v135, %v284
    %286 = vmatprep.mubr.f32.mxu0 0.0
    %287 = vmatmul.mubr.f32.gmra.mrb[0].mxu0 %v76
    %v288 = vpop.f32.mrb[0].mxu0
    %v289 = vadd.f32 %v131, %v288
    %v290 = vpop.f32.mrb[0].mxu0
    %v291 = vadd.f32 %v135, %v290
    %292 = vmatprep.mubr.f32.mxu0 0.0
    %293 = vmatmul.mubr.f32.gmra.mrb[0].mxu0 %v77
    %v294 = vpop.f32.mrb[0].mxu0
    %v295 = vadd.f32 %v131, %v294
    %v296 = vpop.f32.mrb[0].mxu0
    %v297 = vadd.f32 %v135, %v296
    %298 = vmatprep.mubr.f32.mxu0 0.0
    %299 = vmatmul.mubr.f32.gmra.mrb[0].mxu0 %v78
    %v300 = vpop.f32.mrb[0].mxu0
    %v301 = vadd.f32 %v131, %v300
    %v302 = vpop.f32.mrb[0].mxu0
    %v303 = vadd.f32 %v135, %v302
    %304 = vmatprep.mubr.f32.mxu0 0.0
    %305 = vmatmul.mubr.f32.gmra.mrb[0].mxu0 %v79
    %v306 = vpop.f32.mrb[0].mxu0
    %v307 = vadd.f32 %v131, %v306
    %v308 = vpop.f32.mrb[0].mxu0
    %v309 = vadd.f32 %v135, %v308
    %310 = vmatprep.mubr.f32.mxu0 0.0
    %311 = vmatmul.mubr.f32.gmra.mrb[0].mxu0 %v80
    %v312 = vpop.f32.mrb[0].mxu0
    %v313 = vadd.f32 %v131, %v312
    %v314 = vpop.f32.mrb[0].mxu0
    %v315 = vadd.f32 %v135, %v314
    %316 = vmatprep.mubr.f32.mxu0 0.0
    %317 = vmatmul.mubr.f32.gmra.mrb[0].mxu0 %v81
    %v318 = vpop.f32.mrb[0].mxu0
    %v319 = vadd.f32 %v131, %v318
    %v320 = vpop.f32.mrb[0].mxu0
    %v321 = vadd.f32 %v135, %v320
    %322 = vmatprep.mubr.f32.mxu0 0.0
    %323 = vmatmul.mubr.f32.gmra.mrb[0].mxu0 %v82
    %v324 = vpop.f32.mrb[0].mxu0
    %v325 = vadd.f32 %v131, %v324
    %v326 = vpop.f32.mrb[0].mxu0
    %v327 = vadd.f32 %v135, %v326
    %328 = vmatprep.mubr.f32.mxu0 0.0
    %329 = vmatmul.mubr.f32.gmra.mrb[0].mxu0 %v83
    %v330 = vpop.f32.mrb[0].mxu0
    %v331 = vadd.f32 %v131, %v330
    %v332 = vpop.f32.mrb[0].mxu0
    %v333 = vadd.f32 %v135, %v332
    %334 = vmatprep.mubr.f32.mxu0 0.0
    %335 = vmatmul.mubr.f32.gmra.mrb[0].mxu0 %v84
    %v336 = vpop.f32.mrb[0].mxu0
    %v337 = vadd.f32 %v131, %v336
    %v338 = vpop.f32.mrb[0].mxu0
    %v339 = vadd.f32 %v135, %v338
    %340 = vmatprep.mubr.f32.mxu0 0.0
    %341 = vmatmul.mubr.f32.gmra.mrb[0].mxu0 %v85
    %v342 = vpop.f32.mrb[0].mxu0
    %v343 = vadd.f32 %v131, %v342
    %v344 = vpop.f32.mrb[0].mxu0
    %v345 = vadd.f32 %v135, %v344
    %346 = vmatprep.mubr.f32.mxu0 0.0
    %347 = vmatmul.mubr.f32.gmra.mrb[0].mxu0 %v86
    %v348 = vpop.f32.mrb[0].mxu0
    %v349 = vadd.f32 %v131, %v348
    %v350 = vpop.f32.mrb[0].mxu0
    %v351 = vadd.f32 %v135, %v350
    %352 = vmatprep.mubr.f32.mxu0 0.0
    %353 = vmatmul.mubr.f32.gmra.mrb[0].mxu0 %v87
    %v354 = vpop.f32.mrb[0].mxu0
    %v355 = vadd.f32 %v131, %v354
    %v356 = vpop.f32.mrb[0].mxu0
    %v357 = vadd.f32 %v135, %v356
    %358 = vmatprep.mubr.f32.mxu0 0.0
    %359 = vmatmul.mubr.f32.gmra.mrb[0].mxu0 %v88
    %v360 = vpop.f32.mrb[0].mxu0
    %v361 = vadd.f32 %v131, %v360
    %v362 = vpop.f32.mrb[0].mxu0
    %v363 = vadd.f32 %v135, %v362
    %364 = vmatprep.mubr.f32.mxu0 0.0
    %365 = vmatmul.mubr.f32.gmra.mrb[0].mxu0 %v89
    %v366 = vpop.f32.mrb[0].mxu0
    %v367 = vadd.f32 %v131, %v366
    %v368 = vpop.f32.mrb[0].mxu0
    %v369 = vadd.f32 %v135, %v368
    %370 = vmatprep.mubr.f32.mxu0 0.0
    %371 = vmatmul.mubr.f32.gmra.mrb[0].mxu0 %v90
    %v372 = vpop.f32.mrb[0].mxu0
    %v373 = vadd.f32 %v131, %v372
    %v374 = vpop.f32.mrb[0].mxu0
    %v375 = vadd.f32 %v135, %v374
    %376 = vmatprep.mubr.f32.mxu0 0.0
    %377 = vmatmul.mubr.f32.gmra.mrb[0].mxu0 %v91
    %v378 = vpop.f32.mrb[0].mxu0
    %v379 = vadd.f32 %v131, %v378
    %v380 = vpop.f32.mrb[0].mxu0
    %v381 = vadd.f32 %v135, %v380
    %382 = vmatprep.mubr.f32.mxu0 0.0
    %383 = vmatmul.mubr.f32.gmra.mrb[0].mxu0 %v92
    %v384 = vpop.f32.mrb[0].mxu0
    %v385 = vadd.f32 %v131, %v384
    %v386 = vpop.f32.mrb[0].mxu0
    %v387 = vadd.f32 %v135, %v386
    %388 = vmatprep.mubr.f32.mxu0 0.0
    %389 = vmatmul.mubr.f32.gmra.mrb[0].mxu0 %v93
    %v390 = vpop.f32.mrb[0].mxu0
    %v391 = vadd.f32 %v131, %v390
    %v392 = vpop.f32.mrb[0].mxu0
    %v393 = vadd.f32 %v135, %v392
    %394 = vdwg.mxu0
    %v395 = vmax.f32 %v205, 0.0
    %v396 = vmax.f32 %v207, 0.0
    %v397 = vmax.f32 %v211, 0.0
    %v398 = vmax.f32 %v213, 0.0
    %v399 = vmax.f32 %v217, 0.0
    %v400 = vmax.f32 %v219, 0.0
    %v401 = vmax.f32 %v223, 0.0
    %v402 = vmax.f32 %v225, 0.0
    %v403 = vmax.f32 %v229, 0.0
    %v404 = vmax.f32 %v231, 0.0
    %v405 = vmax.f32 %v235, 0.0
    %v406 = vmax.f32 %v237, 0.0
    %v407 = vmax.f32 %v241, 0.0
    %v408 = vmax.f32 %v243, 0.0
    %v409 = vmax.f32 %v247, 0.0
    %v410 = vmax.f32 %v249, 0.0
    %v411 = vmax.f32 %v253, 0.0
    %v412 = vmax.f32 %v255, 0.0
    %v413 = vmax.f32 %v259, 0.0
    %v414 = vmax.f32 %v261, 0.0
    %v415 = vmax.f32 %v265, 0.0
    %v416 = vmax.f32 %v267, 0.0
    %v417 = vmax.f32 %v271, 0.0
    %v418 = vmax.f32 %v273, 0.0
    %v419 = vmax.f32 %v277, 0.0
    %v420 = vmax.f32 %v279, 0.0
    %v421 = vmax.f32 %v283, 0.0
    %v422 = vmax.f32 %v285, 0.0
    %v423 = vmax.f32 %v289, 0.0
    %v424 = vmax.f32 %v291, 0.0
    %v425 = vmax.f32 %v295, 0.0
    %v426 = vmax.f32 %v297, 0.0
    %v427 = vmax.f32 %v301, 0.0
    %v428 = vmax.f32 %v303, 0.0
    %v429 = vmax.f32 %v307, 0.0
    %v430 = vmax.f32 %v309, 0.0
    %v431 = vmax.f32 %v313, 0.0
    %v432 = vmax.f32 %v315, 0.0
    %v433 = vmax.f32 %v319, 0.0
    %v434 = vmax.f32 %v321, 0.0
    %v435 = vmax.f32 %v325, 0.0
    %v436 = vmax.f32 %v327, 0.0
    %v437 = vmax.f32 %v331, 0.0
    %v438 = vmax.f32 %v333, 0.0
    %v439 = vmax.f32 %v337, 0.0
    %v440 = vmax.f32 %v339, 0.0
    %v441 = vmax.f32 %v343, 0.0
    %v442 = vmax.f32 %v345, 0.0
    %v443 = vmax.f32 %v349, 0.0
    %v444 = vmax.f32 %v351, 0.0
    %v445 = vmax.f32 %v355, 0.0
    %v446 = vmax.f32 %v357, 0.0
    %v447 = vmax.f32 %v361, 0.0
    %v448 = vmax.f32 %v363, 0.0
    %v449 = vmax.f32 %v367, 0.0
    %v450 = vmax.f32 %v369, 0.0
    %v451 = vmax.f32 %v373, 0.0
    %v452 = vmax.f32 %v375, 0.0
    %v453 = vmax.f32 %v379, 0.0
    %v454 = vmax.f32 %v381, 0.0
    %v455 = vmax.f32 %v385, 0.0
    %v456 = vmax.f32 %v387, 0.0
    %v457 = vmax.f32 %v391, 0.0
    %v458 = vmax.f32 %v393, 0.0
    %v459 = vld [vmem:[#allocation7] sm:$0xff]
    %v460 = vld [vmem:[#allocation7 + $0x8] sm:$0xff]
    %v461 = vld [vmem:[#allocation7 + $0x10] sm:$0xff]
    %v462 = vld [vmem:[#allocation7 + $0x18] sm:$0xff]
    %v463 = vld [vmem:[#allocation7 + $0x20] sm:$0xff]
    %v464 = vld [vmem:[#allocation7 + $0x28] sm:$0xff]
    %v465 = vld [vmem:[#allocation7 + $0x30] sm:$0xff]
    %v466 = vld [vmem:[#allocation7 + $0x38] sm:$0xff]
    %v467 = vld [vmem:[#allocation7 + $0x40] sm:$0xff]
    %v468 = vld [vmem:[#allocation7 + $0x48] sm:$0xff]
    %v469 = vld [vmem:[#allocation7 + $0x50] sm:$0xff]
    %v470 = vld [vmem:[#allocation7 + $0x58] sm:$0xff]
    %v471 = vld [vmem:[#allocation7 + $0x60] sm:$0xff]
    %v472 = vld [vmem:[#allocation7 + $0x68] sm:$0xff]
    %v473 = vld [vmem:[#allocation7 + $0x70] sm:$0xff]
    %v474 = vld [vmem:[#allocation7 + $0x78] sm:$0xff]
    %v475 = vld [vmem:[#allocation7 + $0x80] sm:$0xff]
    %v476 = vld [vmem:[#allocation7 + $0x88] sm:$0xff]
    %v477 = vld [vmem:[#allocation7 + $0x90] sm:$0xff]
    %v478 = vld [vmem:[#allocation7 + $0x98] sm:$0xff]
    %v479 = vld [vmem:[#allocation7 + $0xa0] sm:$0xff]
    %v480 = vld [vmem:[#allocation7 + $0xa8] sm:$0xff]
    %v481 = vld [vmem:[#allocation7 + $0xb0] sm:$0xff]
    %v482 = vld [vmem:[#allocation7 + $0xb8] sm:$0xff]
    %v483 = vld [vmem:[#allocation7 + $0xc0] sm:$0xff]
    %v484 = vld [vmem:[#allocation7 + $0xc8] sm:$0xff]
    %v485 = vld [vmem:[#allocation7 + $0xd0] sm:$0xff]
    %v486 = vld [vmem:[#allocation7 + $0xd8] sm:$0xff]
    %v487 = vld [vmem:[#allocation7 + $0xe0] sm:$0xff]
    %v488 = vld [vmem:[#allocation7 + $0xe8] sm:$0xff]
    %v489 = vld [vmem:[#allocation7 + $0xf0] sm:$0xff]
    %v490 = vld [vmem:[#allocation7 + $0xf8] sm:$0xff]
    %v491 = vld [vmem:[%s4] sm:$0x1]
    %v493 = vlaneseq
    %v494 = vshrl.u32 %v493, 7
    %v495 = vsub.s32 0, %v494
    %v496 = vrot.slane %v491, %v495
    %498 = vmatprep.subr.mxu0 0.0
    %499 = vmatpush1.msra.mxu0 %v459
    %500 = vmatprep.subr.mxu0 0.0
    %501 = vmatpush1.msra.mxu0 %v460
    %502 = vmatprep.subr.mxu0 0.0
    %503 = vmatpush1.msra.mxu0 %v461
    %504 = vmatprep.subr.mxu0 0.0
    %505 = vmatpush1.msra.mxu0 %v462
    %506 = vmatprep.subr.mxu0 0.0
    %507 = vmatpush1.msra.mxu0 %v463
    %508 = vmatprep.subr.mxu0 0.0
    %509 = vmatpush1.msra.mxu0 %v464
    %510 = vmatprep.subr.mxu0 0.0
    %511 = vmatpush1.msra.mxu0 %v465
    %512 = vmatprep.subr.mxu0 0.0
    %513 = vmatpush1.msra.mxu0 %v466
    %514 = vmatprep.subr.mxu0 0.0
    %515 = vmatpush1.msra.mxu0 %v467
    %516 = vmatprep.subr.mxu0 0.0
    %517 = vmatpush1.msra.mxu0 %v468
    %518 = vmatprep.subr.mxu0 0.0
    %519 = vmatpush1.msra.mxu0 %v469
    %520 = vmatprep.subr.mxu0 0.0
    %521 = vmatpush1.msra.mxu0 %v470
    %522 = vmatprep.subr.mxu0 0.0
    %523 = vmatpush1.msra.mxu0 %v471
    %524 = vmatprep.subr.mxu0 0.0
    %525 = vmatpush1.msra.mxu0 %v472
    %526 = vmatprep.subr.mxu0 0.0
    %527 = vmatpush1.msra.mxu0 %v473
    %528 = vmatprep.subr.mxu0 0.0
    %529 = vmatpush1.msra.mxu0 %v474
    %530 = vmatprep.subr.mxu0 0.0
    %531 = vmatpush1.msra.mxu0 %v475
    %532 = vmatprep.subr.mxu0 0.0
    %533 = vmatpush1.msra.mxu0 %v476
    %534 = vmatprep.subr.mxu0 0.0
    %535 = vmatpush1.msra.mxu0 %v477
    %536 = vmatprep.subr.mxu0 0.0
    %537 = vmatpush1.msra.mxu0 %v478
    %538 = vmatprep.subr.mxu0 0.0
    %539 = vmatpush1.msra.mxu0 %v479
    %540 = vmatprep.subr.mxu0 0.0
    %541 = vmatpush1.msra.mxu0 %v480
    %542 = vmatprep.subr.mxu0 0.0
    %543 = vmatpush1.msra.mxu0 %v481
    %544 = vmatprep.subr.mxu0 0.0
    %545 = vmatpush1.msra.mxu0 %v482
    %546 = vmatprep.subr.mxu0 0.0
    %547 = vmatpush1.msra.mxu0 %v483
    %548 = vmatprep.subr.mxu0 0.0
    %549 = vmatpush1.msra.mxu0 %v484
    %550 = vmatprep.subr.mxu0 0.0
    %551 = vmatpush1.msra.mxu0 %v485
    %552 = vmatprep.subr.mxu0 0.0
    %553 = vmatpush1.msra.mxu0 %v486
    %554 = vmatprep.subr.mxu0 0.0
    %555 = vmatpush1.msra.mxu0 %v487
    %556 = vmatprep.subr.mxu0 0.0
    %557 = vmatpush1.msra.mxu0 %v488
    %558 = vmatprep.subr.mxu0 0.0
    %559 = vmatpush1.msra.mxu0 %v489
    %560 = vmatprep.subr.mxu0 0.0
    %561 = vmatpush1.msra.mxu0 %v490
    %562 = vmatprep.mubr.f32.mxu0 %v396
    %563 = vmatmul.mubr.f32.gmra.mrb[0].mxu0 %v395
    %v564 = vpop.f32.mrb[0].mxu0
    %v565 = vadd.f32 %v496, %v564
    %v566 = vpop.f32.mrb[0].mxu0
    %567 = vmatprep.mubr.f32.mxu0 %v398
    %568 = vmatmul.mubr.f32.gmra.mrb[0].mxu0 %v397
    %v569 = vpop.f32.mrb[0].mxu0
    %v570 = vadd.f32 %v496, %v569
    %v571 = vpop.f32.mrb[0].mxu0
    %572 = vmatprep.mubr.f32.mxu0 %v400
    %573 = vmatmul.mubr.f32.gmra.mrb[0].mxu0 %v399
    %v574 = vpop.f32.mrb[0].mxu0
    %v575 = vadd.f32 %v496, %v574
    %v576 = vpop.f32.mrb[0].mxu0
    %577 = vmatprep.mubr.f32.mxu0 %v402
    %578 = vmatmul.mubr.f32.gmra.mrb[0].mxu0 %v401
    %v579 = vpop.f32.mrb[0].mxu0
    %v580 = vadd.f32 %v496, %v579
    %v581 = vpop.f32.mrb[0].mxu0
    %582 = vmatprep.mubr.f32.mxu0 %v404
    %583 = vmatmul.mubr.f32.gmra.mrb[0].mxu0 %v403
    %v584 = vpop.f32.mrb[0].mxu0
    %v585 = vadd.f32 %v496, %v584
    %v586 = vpop.f32.mrb[0].mxu0
    %587 = vmatprep.mubr.f32.mxu0 %v406
    %588 = vmatmul.mubr.f32.gmra.mrb[0].mxu0 %v405
    %v589 = vpop.f32.mrb[0].mxu0
    %v590 = vadd.f32 %v496, %v589
    %v591 = vpop.f32.mrb[0].mxu0
    %592 = vmatprep.mubr.f32.mxu0 %v408
    %593 = vmatmul.mubr.f32.gmra.mrb[0].mxu0 %v407
    %v594 = vpop.f32.mrb[0].mxu0
    %v595 = vadd.f32 %v496, %v594
    %v596 = vpop.f32.mrb[0].mxu0
    %597 = vmatprep.mubr.f32.mxu0 %v410
    %598 = vmatmul.mubr.f32.gmra.mrb[0].mxu0 %v409
    %v599 = vpop.f32.mrb[0].mxu0
    %v600 = vadd.f32 %v496, %v599
    %v601 = vpop.f32.mrb[0].mxu0
    %602 = vmatprep.mubr.f32.mxu0 %v412
    %603 = vmatmul.mubr.f32.gmra.mrb[0].mxu0 %v411
    %v604 = vpop.f32.mrb[0].mxu0
    %v605 = vadd.f32 %v496, %v604
    %v606 = vpop.f32.mrb[0].mxu0
    %607 = vmatprep.mubr.f32.mxu0 %v414
    %608 = vmatmul.mubr.f32.gmra.mrb[0].mxu0 %v413
    %v609 = vpop.f32.mrb[0].mxu0
    %v610 = vadd.f32 %v496, %v609
    %v611 = vpop.f32.mrb[0].mxu0
    %612 = vmatprep.mubr.f32.mxu0 %v416
    %613 = vmatmul.mubr.f32.gmra.mrb[0].mxu0 %v415
    %v614 = vpop.f32.mrb[0].mxu0
    %v615 = vadd.f32 %v496, %v614
    %v616 = vpop.f32.mrb[0].mxu0
    %617 = vmatprep.mubr.f32.mxu0 %v418
    %618 = vmatmul.mubr.f32.gmra.mrb[0].mxu0 %v417
    %v619 = vpop.f32.mrb[0].mxu0
    %v620 = vadd.f32 %v496, %v619
    %v621 = vpop.f32.mrb[0].mxu0
    %622 = vmatprep.mubr.f32.mxu0 %v420
    %623 = vmatmul.mubr.f32.gmra.mrb[0].mxu0 %v419
    %v624 = vpop.f32.mrb[0].mxu0
    %v625 = vadd.f32 %v496, %v624
    %v626 = vpop.f32.mrb[0].mxu0
    %627 = vmatprep.mubr.f32.mxu0 %v422
    %628 = vmatmul.mubr.f32.gmra.mrb[0].mxu0 %v421
    %v629 = vpop.f32.mrb[0].mxu0
    %v630 = vadd.f32 %v496, %v629
    %v631 = vpop.f32.mrb[0].mxu0
    %632 = vmatprep.mubr.f32.mxu0 %v424
    %633 = vmatmul.mubr.f32.gmra.mrb[0].mxu0 %v423
    %v634 = vpop.f32.mrb[0].mxu0
    %v635 = vadd.f32 %v496, %v634
    %v636 = vpop.f32.mrb[0].mxu0
    %637 = vmatprep.mubr.f32.mxu0 %v426
    %638 = vmatmul.mubr.f32.gmra.mrb[0].mxu0 %v425
    %v639 = vpop.f32.mrb[0].mxu0
    %v640 = vadd.f32 %v496, %v639
    %v641 = vpop.f32.mrb[0].mxu0
    %642 = vmatprep.mubr.f32.mxu0 %v428
    %643 = vmatmul.mubr.f32.gmra.mrb[0].mxu0 %v427
    %v644 = vpop.f32.mrb[0].mxu0
    %v645 = vadd.f32 %v496, %v644
    %v646 = vpop.f32.mrb[0].mxu0
    %647 = vmatprep.mubr.f32.mxu0 %v430
    %648 = vmatmul.mubr.f32.gmra.mrb[0].mxu0 %v429
    %v649 = vpop.f32.mrb[0].mxu0
    %v650 = vadd.f32 %v496, %v649
    %v651 = vpop.f32.mrb[0].mxu0
    %652 = vmatprep.mubr.f32.mxu0 %v432
    %653 = vmatmul.mubr.f32.gmra.mrb[0].mxu0 %v431
    %v654 = vpop.f32.mrb[0].mxu0
    %v655 = vadd.f32 %v496, %v654
    %v656 = vpop.f32.mrb[0].mxu0
    %657 = vmatprep.mubr.f32.mxu0 %v434
    %658 = vmatmul.mubr.f32.gmra.mrb[0].mxu0 %v433
    %v659 = vpop.f32.mrb[0].mxu0
    %v660 = vadd.f32 %v496, %v659
    %v661 = vpop.f32.mrb[0].mxu0
    %662 = vmatprep.mubr.f32.mxu0 %v436
    %663 = vmatmul.mubr.f32.gmra.mrb[0].mxu0 %v435
    %v664 = vpop.f32.mrb[0].mxu0
    %v665 = vadd.f32 %v496, %v664
    %v666 = vpop.f32.mrb[0].mxu0
    %667 = vmatprep.mubr.f32.mxu0 %v438
    %668 = vmatmul.mubr.f32.gmra.mrb[0].mxu0 %v437
    %v669 = vpop.f32.mrb[0].mxu0
    %v670 = vadd.f32 %v496, %v669
    %v671 = vpop.f32.mrb[0].mxu0
    %672 = vmatprep.mubr.f32.mxu0 %v440
    %673 = vmatmul.mubr.f32.gmra.mrb[0].mxu0 %v439
    %v674 = vpop.f32.mrb[0].mxu0
    %v675 = vadd.f32 %v496, %v674
    %v676 = vpop.f32.mrb[0].mxu0
    %677 = vmatprep.mubr.f32.mxu0 %v442
    %678 = vmatmul.mubr.f32.gmra.mrb[0].mxu0 %v441
    %v679 = vpop.f32.mrb[0].mxu0
    %v680 = vadd.f32 %v496, %v679
    %v681 = vpop.f32.mrb[0].mxu0
    %682 = vmatprep.mubr.f32.mxu0 %v444
    %683 = vmatmul.mubr.f32.gmra.mrb[0].mxu0 %v443
    %v684 = vpop.f32.mrb[0].mxu0
    %v685 = vadd.f32 %v496, %v684
    %v686 = vpop.f32.mrb[0].mxu0
    %687 = vmatprep.mubr.f32.mxu0 %v446
    %688 = vmatmul.mubr.f32.gmra.mrb[0].mxu0 %v445
    %v689 = vpop.f32.mrb[0].mxu0
    %v690 = vadd.f32 %v496, %v689
    %v691 = vpop.f32.mrb[0].mxu0
    %692 = vmatprep.mubr.f32.mxu0 %v448
    %693 = vmatmul.mubr.f32.gmra.mrb[0].mxu0 %v447
    %v694 = vpop.f32.mrb[0].mxu0
    %v695 = vadd.f32 %v496, %v694
    %v696 = vpop.f32.mrb[0].mxu0
    %697 = vmatprep.mubr.f32.mxu0 %v450
    %698 = vmatmul.mubr.f32.gmra.mrb[0].mxu0 %v449
    %v699 = vpop.f32.mrb[0].mxu0
    %v700 = vadd.f32 %v496, %v699
    %v701 = vpop.f32.mrb[0].mxu0
    %702 = vmatprep.mubr.f32.mxu0 %v452
    %703 = vmatmul.mubr.f32.gmra.mrb[0].mxu0 %v451
    %v704 = vpop.f32.mrb[0].mxu0
    %v705 = vadd.f32 %v496, %v704
    %v706 = vpop.f32.mrb[0].mxu0
    %707 = vmatprep.mubr.f32.mxu0 %v454
    %708 = vmatmul.mubr.f32.gmra.mrb[0].mxu0 %v453
    %v709 = vpop.f32.mrb[0].mxu0
    %v710 = vadd.f32 %v496, %v709
    %v711 = vpop.f32.mrb[0].mxu0
    %712 = vmatprep.mubr.f32.mxu0 %v456
    %713 = vmatmul.mubr.f32.gmra.mrb[0].mxu0 %v455
    %v714 = vpop.f32.mrb[0].mxu0
    %v715 = vadd.f32 %v496, %v714
    %v716 = vpop.f32.mrb[0].mxu0
    %717 = vmatprep.mubr.f32.mxu0 %v458
    %718 = vmatmul.mubr.f32.gmra.mrb[0].mxu0 %v457
    %v719 = vpop.f32.mrb[0].mxu0
    %v720 = vadd.f32 %v496, %v719
    %v721 = vpop.f32.mrb[0].mxu0
    %722 = vdwg.mxu0
    %723 = vst [vmem:[#allocation8] sm:$0xff] %v565
    %724 = vst [vmem:[#allocation8 + $0x8] sm:$0xff] %v570
    %725 = vst [vmem:[#allocation8 + $0x10] sm:$0xff] %v575
    %726 = vst [vmem:[#allocation8 + $0x18] sm:$0xff] %v580
    %727 = vst [vmem:[#allocation8 + $0x20] sm:$0xff] %v585
    %728 = vst [vmem:[#allocation8 + $0x28] sm:$0xff] %v590
    %729 = vst [vmem:[#allocation8 + $0x30] sm:$0xff] %v595
    %730 = vst [vmem:[#allocation8 + $0x38] sm:$0xff] %v600
    %731 = vst [vmem:[#allocation8 + $0x40] sm:$0xff] %v605
    %732 = vst [vmem:[#allocation8 + $0x48] sm:$0xff] %v610
    %733 = vst [vmem:[#allocation8 + $0x50] sm:$0xff] %v615
    %734 = vst [vmem:[#allocation8 + $0x58] sm:$0xff] %v620
    %735 = vst [vmem:[#allocation8 + $0x60] sm:$0xff] %v625
    %736 = vst [vmem:[#allocation8 + $0x68] sm:$0xff] %v630
    %737 = vst [vmem:[#allocation8 + $0x70] sm:$0xff] %v635
    %738 = vst [vmem:[#allocation8 + $0x78] sm:$0xff] %v640
    %739 = vst [vmem:[#allocation8 + $0x80] sm:$0xff] %v645
    %740 = vst [vmem:[#allocation8 + $0x88] sm:$0xff] %v650
    %741 = vst [vmem:[#allocation8 + $0x90] sm:$0xff] %v655
    %742 = vst [vmem:[#allocation8 + $0x98] sm:$0xff] %v660
    %743 = vst [vmem:[#allocation8 + $0xa0] sm:$0xff] %v665
    %744 = vst [vmem:[#allocation8 + $0xa8] sm:$0xff] %v670
    %745 = vst [vmem:[#allocation8 + $0xb0] sm:$0xff] %v675
    %746 = vst [vmem:[#allocation8 + $0xb8] sm:$0xff] %v680
    %747 = vst [vmem:[#allocation8 + $0xc0] sm:$0xff] %v685
    %748 = vst [vmem:[#allocation8 + $0xc8] sm:$0xff] %v690
    %749 = vst [vmem:[#allocation8 + $0xd0] sm:$0xff] %v695
    %750 = vst [vmem:[#allocation8 + $0xd8] sm:$0xff] %v700
    %751 = vst [vmem:[#allocation8 + $0xe0] sm:$0xff] %v705
    %752 = vst [vmem:[#allocation8 + $0xe8] sm:$0xff] %v710
    %753 = vst [vmem:[#allocation8 + $0xf0] sm:$0xff] %v715
    %754 = vst [vmem:[#allocation8 + $0xf8] sm:$0xff] %v720
    // Predicated region
    $region34: #{tpu_custom_call.1} parent=1 // pred_check
      _
    $region35: #{tpu_custom_call.1} parent=1 // pred_check_branch
      %756 = sbr.rel (0) target = $region37
    $region36: #{tpu_custom_call.1} parent=1 // pred_region
      %s758 = ssub.s32 4096, 4096
      %759 = vsyncadd [#allocation4], %s758
      %s760 = sshll.u32 [#allocation8], 4
      %s761 = int_to_ptr.vmem [resolvable:$true] %s760
      %766 = dma.vmem_to_hbm [thread:$0]  %s761, 4096, %s5, [#allocation4], 128, 128, 8
    $region37: #{tpu_custom_call.1} parent=1 // pred_fallthru
      _
    // Predicated region
    $region38: #{tpu_custom_call.1} parent=1 // pred_check
      _
    $region39: #{tpu_custom_call.1} parent=1 // pred_check_branch
      %768 = sbr.rel (0) target = $region41
    $region40: #{tpu_custom_call.1} parent=1 // pred_region
      %769 = dma.done [#allocation4], 4096
    $region41: #{tpu_custom_call.1} parent=1 // pred_fallthru
      _
    %770 = vsyncpa [#allocation3], 1
    %771 = vsyncpa [#allocation6], 1
    %772 = vsyncpa [#allocation4], 1

</llo_original>
